<compile_context>
chip_gen: v7x
topology: tpu7x:2x2x1
jax: 0.10.0
libtpu: 0.0.40
codegen_flags: <defaults>
</compile_context>

<pallas_src>
import functools

import jax
import jax.numpy as jnp
from jax.experimental import pallas as pl
from jax.experimental.pallas import tpu as pltpu


def aft_full_kernel(x_ref, w_ref, b_ref, ew_ref, o_ref, xl_s, ctx_s, *, bs, d):
    bd = bs * d

    # Lane-stack the batch: x_l[:, b*d:(b+1)*d] = x[b]  ->  (n, bs*d).
    for b in range(bs):
        xl_s[:, b * d:(b + 1) * d] = x_ref[b]

    # Fused, batch-block-diagonal QKV projection: ONE MXU matmul.
    # Output lanes: [q_0 | q_1 | k_0 | k_1 | v_0 | v_1] (each d=32 lanes).
    qkv = jnp.dot(xl_s[...], w_ref[...],
                  preferred_element_type=jnp.float32) + b_ref[...]   # (n, 3*bs*d)
    q_l = qkv[:, :bd]
    k_l = qkv[:, bd:2 * bd]
    v_l = qkv[:, 2 * bd:]

    # Stabilize: per-(batch, feature) max of k; cancels exactly in num/den.
    k_l = k_l - jnp.max(k_l, axis=0, keepdims=True)
    ek_l = jnp.exp(k_l)                                              # (n, bs*d)

    # ctx lanes = [ek*v (both batches) | ek (both batches)] -> (n, 2*bs*d)=128.
    # Two straight stores into VMEM scratch (no in-register lane concat).
    ctx_s[:, :bd] = ek_l * v_l
    ctx_s[:, bd:] = ek_l

    # Numerator/denominator: ONE MXU matmul, exactly 128 output lanes.
    # nd lanes = [num_0 | num_1 | den_0 | den_1].
    nd = jnp.dot(ew_ref[...], ctx_s[...],
                 preferred_element_type=jnp.float32)                 # (n, 2*bs*d)
    num = nd[:, :bd]
    den = nd[:, bd:]

    # Lane-dense (n, bs*d) output store.
    o_ref[...] = jax.nn.sigmoid(q_l) * (num * pl.reciprocal(den, approx=False))


def prepare_aft_params(wq_t, bq, wk_t, bk, wv_t, bv, pos, bs):
    """One-time parameter prep (analogous to module init).

    Weights are passed pre-transposed as (in, out) so the kernel computes
    x @ W + b (== PyTorch x @ W.T + b).
    Returns:
      w_bd : (bs*d, 3*bs*d) batch-block-diagonal fused [Wq|Wk|Wv]
      b_bd : (1, 3*bs*d)    fused biases, repeated per batch
      ew   : (n, n)         exp(position_biases - rowmax) (rowmax cancels)
    """
    d = wq_t.shape[0]
    eye = jnp.eye(bs, dtype=jnp.float32)
    w_bd = jnp.concatenate(
        [jnp.kron(eye, w.astype(jnp.float32)) for w in (wq_t, wk_t, wv_t)],
        axis=1)                                                      # (bs*d, 3*bs*d)
    b_bd = jnp.concatenate(
        [jnp.tile(jnp.reshape(b, (1, d)).astype(jnp.float32), (1, bs))
         for b in (bq, bk, bv)], axis=1)                             # (1, 3*bs*d)
    pos = pos.astype(jnp.float32)
    ew = jnp.exp(pos - jnp.max(pos, axis=1, keepdims=True))          # (n, n)
    return w_bd, b_bd, ew


@jax.jit
def aft_full(x, w_bd, b_bd, ew):
    x = x.astype(jnp.float32)
    bs, n, d = x.shape
    bd = bs * d

    cost = pl.CostEstimate(
        flops=2 * (n * bd * 3 * bd + n * n * 2 * bd),
        transcendentals=3 * n * bd,
        bytes_accessed=4 * (2 * bs * n * d + bd * 3 * bd + 3 * bd + n * n),
    )

    out2d = pl.pallas_call(
        functools.partial(aft_full_kernel, bs=bs, d=d),
        out_shape=jax.ShapeDtypeStruct((n, bd), jnp.float32),
        grid=(1,),
        in_specs=[
            pl.BlockSpec((bs, n, d), lambda i: (0, 0, 0)),       # x (full block)
            pl.BlockSpec((bd, 3 * bd), lambda i: (0, 0)),        # fused block-diag W
            pl.BlockSpec((1, 3 * bd), lambda i: (0, 0)),         # fused bias
            pl.BlockSpec((n, n), lambda i: (0, 0)),              # exp(position_biases)
        ],
        out_specs=pl.BlockSpec((n, bd), lambda i: (0, 0)),
        scratch_shapes=[
            pltpu.VMEM((n, bd), jnp.float32),        # lane-stacked x
            pltpu.VMEM((n, 2 * bd), jnp.float32),    # ctx = [ek*v | ek]
        ],
        compiler_params=pltpu.CompilerParams(
            dimension_semantics=("arbitrary",)),
        cost_estimate=cost,
    )(x, w_bd, b_bd, ew)

    # (n, bs*d) -> (bs, n, d); this reshape+transpose fuses into the jit.
    return jnp.transpose(out2d.reshape(n, bs, d), (1, 0, 2))


def aft_full_reference(x, wq_t, bq, wk_t, bk, wv_t, bv, pos):
    # Pure-JAX transcription of the PyTorch forward (for verification).
    x = x.astype(jnp.float32)
    q = x @ wq_t + bq
    k = x @ wk_t + bk
    v = x @ wv_t + bv
    e = jnp.exp(k[None] + pos[:, None, :, None])             # (n, bs, n, d)
    num = jnp.sum(e * v[None], axis=2)                       # (n, bs, d)
    den = jnp.sum(e, axis=2)                                  # (n, bs, d)
    out = num / den
    return jax.nn.sigmoid(q) * jnp.transpose(out, (1, 0, 2))


if __name__ == "__main__":
    bs, n, d_model = 2, 49, 32   # matches AFT_FULL(d_model=32, n=49)

    key = jax.random.PRNGKey(0)
    kx, kq, kk, kv = jax.random.split(key, 4)

    x = jax.random.normal(kx, (bs, n, d_model), dtype=jnp.float32)

    # Deterministic params mirroring init_weights():
    #   nn.Linear weights ~ N(0, std=0.001), biases = 0
    #   position_biases = ones((n, n))
    # Weights stored pre-transposed as (in, out).
    wq_t = 0.001 * jax.random.normal(kq, (d_model, d_model), dtype=jnp.float32)
    wk_t = 0.001 * jax.random.normal(kk, (d_model, d_model), dtype=jnp.float32)
    wv_t = 0.001 * jax.random.normal(kv, (d_model, d_model), dtype=jnp.float32)
    bq = jnp.zeros((1, d_model), dtype=jnp.float32)
    bk = jnp.zeros((1, d_model), dtype=jnp.float32)
    bv = jnp.zeros((1, d_model), dtype=jnp.float32)
    pos = jnp.ones((n, n), dtype=jnp.float32)

    # Parameter prep happens once (like module init), outside the per-call path.
    w_bd, b_bd, ew = prepare_aft_params(wq_t, bq, wk_t, bk, wv_t, bv, pos, bs)

    out = aft_full(x, w_bd, b_bd, ew)
    out = jax.block_until_ready(out)

    ref = aft_full_reference(x, wq_t, bq[0], wk_t, bk[0], wv_t, bv[0], pos)
    assert out.shape == (bs, n, d_model)
    assert jnp.allclose(out, ref, rtol=1e-5, atol=1e-6), "mismatch vs reference"

    print("KERNEL_OK")
</pallas_src>

<mosaic_0001>
module attributes {stable_mosaic.version = 11 : i64} {
  func.func @aft_full_kernel(%arg0: i32, %arg1: memref<2x49x32xf32, #tpu.memory_space<vmem>>, %arg2: memref<64x192xf32, #tpu.memory_space<vmem>>, %arg3: memref<1x192xf32, #tpu.memory_space<vmem>>, %arg4: memref<49x49xf32, #tpu.memory_space<vmem>>, %arg5: memref<49x64xf32, #tpu.memory_space<vmem>>, %arg6: memref<49x64xf32, #tpu.memory_space<vmem>>, %arg7: memref<49x128xf32, #tpu.memory_space<vmem>>) attributes {dimension_semantics = [#tpu.dimension_semantics<arbitrary>], iteration_bounds = array<i64: 1>, scalar_prefetch = 0 : i64, scratch_operands = 2 : i64, tpu.core_type = #tpu.core_type<tc>, window_params = [{pipeline_mode = #tpu.pipeline_mode<synchronous>, transform_indices = @transform_0, window_bounds = array<i64: 2, 49, 32>}, {pipeline_mode = #tpu.pipeline_mode<synchronous>, transform_indices = @transform_1, window_bounds = array<i64: 64, 192>}, {pipeline_mode = #tpu.pipeline_mode<synchronous>, transform_indices = @transform_2, window_bounds = array<i64: 1, 192>}, {pipeline_mode = #tpu.pipeline_mode<synchronous>, transform_indices = @transform_3, window_bounds = array<i64: 49, 49>}, {pipeline_mode = #tpu.pipeline_mode<synchronous>, transform_indices = @transform_4, window_bounds = array<i64: 49, 64>}]} {
    %c0 = arith.constant 0 : index
    %c0_0 = arith.constant 0 : index
    %c0_1 = arith.constant 0 : index
    %0 = vector.load %arg1[%c0, %c0_0, %c0_1] : memref<2x49x32xf32, #tpu.memory_space<vmem>>, vector<1x49x32xf32>
    %1 = vector.shape_cast %0 : vector<1x49x32xf32> to vector<49x32xf32>
    %c0_2 = arith.constant 0 : index
    %c0_3 = arith.constant 0 : index
    %2 = vector.load %arg6[%c0_2, %c0_3] : memref<49x64xf32, #tpu.memory_space<vmem>>, vector<49x32xf32>
    tpu.vector_store %arg6[%c0_2, %c0_3], %1 {strides = array<i32>} : memref<49x64xf32, #tpu.memory_space<vmem>>, vector<49x32xf32>,
    %c1 = arith.constant 1 : index
    %c0_4 = arith.constant 0 : index
    %c0_5 = arith.constant 0 : index
    %3 = vector.load %arg1[%c1, %c0_4, %c0_5] : memref<2x49x32xf32, #tpu.memory_space<vmem>>, vector<1x49x32xf32>
    %4 = vector.shape_cast %3 : vector<1x49x32xf32> to vector<49x32xf32>
    %c0_6 = arith.constant 0 : index
    %c32 = arith.constant 32 : index
    %5 = vector.load %arg6[%c0_6, %c32] : memref<49x64xf32, #tpu.memory_space<vmem>>, vector<49x32xf32>
    tpu.vector_store %arg6[%c0_6, %c32], %4 {strides = array<i32>} : memref<49x64xf32, #tpu.memory_space<vmem>>, vector<49x32xf32>,
    %c0_7 = arith.constant 0 : index
    %c0_8 = arith.constant 0 : index
    %6 = vector.load %arg6[%c0_7, %c0_8] : memref<49x64xf32, #tpu.memory_space<vmem>>, vector<49x64xf32>
    %c0_9 = arith.constant 0 : index
    %c0_10 = arith.constant 0 : index
    %7 = vector.load %arg2[%c0_9, %c0_10] : memref<64x192xf32, #tpu.memory_space<vmem>>, vector<64x192xf32>
    %cst = arith.constant dense<0.000000e+00> : vector<49x192xf32>
    %8 = tpu.matmul %6, %7, %cst {dimension_numbers = #tpu.dot_dimension_numbers<[1], [0], [0], [1], [0, 0, 1, 1], [], []>} : vector<49x64xf32>, vector<64x192xf32>, vector<49x192xf32> -> vector<49x192xf32>
    %c0_11 = arith.constant 0 : index
    %c0_12 = arith.constant 0 : index
    %9 = vector.load %arg3[%c0_11, %c0_12] : memref<1x192xf32, #tpu.memory_space<vmem>>, vector<1x192xf32>
    %10 = vector.broadcast %9 : vector<1x192xf32> to vector<49x192xf32>
    %11 = arith.addf %8, %10 : vector<49x192xf32>
    %12 = vector.extract_strided_slice %11 {offsets = [0, 0], sizes = [49, 64], strides = [1, 1]} : vector<49x192xf32> to vector<49x64xf32>
    %13 = vector.extract_strided_slice %11 {offsets = [0, 64], sizes = [49, 64], strides = [1, 1]} : vector<49x192xf32> to vector<49x64xf32>
    %14 = vector.extract_strided_slice %11 {offsets = [0, 128], sizes = [49, 64], strides = [1, 1]} : vector<49x192xf32> to vector<49x64xf32>
    %cst_13 = arith.constant dense<0xFF800000> : vector<64xf32>
    %15 = vector.multi_reduction <maximumf>, %13, %cst_13 [0] : vector<49x64xf32> to vector<64xf32>
    %16 = vector.shape_cast %15 : vector<64xf32> to vector<1x64xf32>
    %17 = vector.broadcast %16 : vector<1x64xf32> to vector<49x64xf32>
    %18 = arith.subf %13, %17 : vector<49x64xf32>
    %19 = math.exp %18 : vector<49x64xf32>
    %20 = arith.mulf %19, %14 : vector<49x64xf32>
    %c0_14 = arith.constant 0 : index
    %c0_15 = arith.constant 0 : index
    %21 = vector.load %arg7[%c0_14, %c0_15] : memref<49x128xf32, #tpu.memory_space<vmem>>, vector<49x64xf32>
    tpu.vector_store %arg7[%c0_14, %c0_15], %20 {strides = array<i32>} : memref<49x128xf32, #tpu.memory_space<vmem>>, vector<49x64xf32>,
    %c0_16 = arith.constant 0 : index
    %c64 = arith.constant 64 : index
    %22 = vector.load %arg7[%c0_16, %c64] : memref<49x128xf32, #tpu.memory_space<vmem>>, vector<49x64xf32>
    tpu.vector_store %arg7[%c0_16, %c64], %19 {strides = array<i32>} : memref<49x128xf32, #tpu.memory_space<vmem>>, vector<49x64xf32>,
    %c0_17 = arith.constant 0 : index
    %c0_18 = arith.constant 0 : index
    %23 = vector.load %arg4[%c0_17, %c0_18] : memref<49x49xf32, #tpu.memory_space<vmem>>, vector<49x49xf32>
    %c0_19 = arith.constant 0 : index
    %c0_20 = arith.constant 0 : index
    %24 = vector.load %arg7[%c0_19, %c0_20] : memref<49x128xf32, #tpu.memory_space<vmem>>, vector<49x128xf32>
    %cst_21 = arith.constant dense<0.000000e+00> : vector<49x128xf32>
    %25 = tpu.matmul %23, %24, %cst_21 {dimension_numbers = #tpu.dot_dimension_numbers<[1], [0], [0], [1], [0, 0, 1, 1], [], []>} : vector<49x49xf32>, vector<49x128xf32>, vector<49x128xf32> -> vector<49x128xf32>
    %26 = vector.extract_strided_slice %25 {offsets = [0, 0], sizes = [49, 64], strides = [1, 1]} : vector<49x128xf32> to vector<49x64xf32>
    %27 = vector.extract_strided_slice %25 {offsets = [0, 64], sizes = [49, 64], strides = [1, 1]} : vector<49x128xf32> to vector<49x64xf32>
    %28 = arith.negf %12 : vector<49x64xf32>
    %29 = math.exp %28 : vector<49x64xf32>
    %cst_22 = arith.constant 1.000000e+00 : f32
    %30 = vector.broadcast %cst_22 : f32 to vector<49x64xf32>
    %31 = arith.addf %30, %29 : vector<49x64xf32>
    %32 = arith.divf %30, %31 : vector<49x64xf32>
    %33 = tpu.reciprocal %27 : vector<49x64xf32> -> vector<49x64xf32>
    %34 = arith.mulf %26, %33 : vector<49x64xf32>
    %35 = arith.mulf %32, %34 : vector<49x64xf32>
    %c0_23 = arith.constant 0 : index
    %c0_24 = arith.constant 0 : index
    %36 = vector.load %arg5[%c0_23, %c0_24] : memref<49x64xf32, #tpu.memory_space<vmem>>, vector<49x64xf32>
    tpu.vector_store %arg5[%c0_23, %c0_24], %35 {strides = array<i32>} : memref<49x64xf32, #tpu.memory_space<vmem>>, vector<49x64xf32>,
    return
  }
  func.func @transform_0(%arg0: i32) -> (i32, i32, i32) {
    %c0_i32 = arith.constant 0 : i32
    %c0_i32_0 = arith.constant 0 : i32
    %c0_i32_1 = arith.constant 0 : i32
    %c0_i32_2 = arith.constant 0 : i32
    return %c0_i32, %c0_i32_0, %c0_i32_1 : i32, i32, i32
  }
  func.func @transform_1(%arg0: i32) -> (i32, i32) {
    %c0_i32 = arith.constant 0 : i32
    %c0_i32_0 = arith.constant 0 : i32
    %c0_i32_1 = arith.constant 0 : i32
    return %c0_i32, %c0_i32_0 : i32, i32
  }
  func.func @transform_2(%arg0: i32) -> (i32, i32) {
    %c0_i32 = arith.constant 0 : i32
    %c0_i32_0 = arith.constant 0 : i32
    %c0_i32_1 = arith.constant 0 : i32
    return %c0_i32, %c0_i32_0 : i32, i32
  }
  func.func @transform_3(%arg0: i32) -> (i32, i32) {
    %c0_i32 = arith.constant 0 : i32
    %c0_i32_0 = arith.constant 0 : i32
    %c0_i32_1 = arith.constant 0 : i32
    return %c0_i32, %c0_i32_0 : i32, i32
  }
  func.func @transform_4(%arg0: i32) -> (i32, i32) {
    %c0_i32 = arith.constant 0 : i32
    %c0_i32_0 = arith.constant 0 : i32
    %c0_i32_1 = arith.constant 0 : i32
    return %c0_i32, %c0_i32_0 : i32, i32
  }
}

</mosaic_0001>

<llo_original>
// kernel: aft_full.1
$region0: #{aft_full.1}
  #allocation0 [shape = 'u32[]', space=smem, size = 0x4, offset = 0x4, fixed_abs, tag = 'smem constant byte address 0x4 - core index']
  #allocation1 [shape = 'u32[144,128]{1,0:T(1,128)}', space=vmem, size = 0x12000, scoped, tag = 'internal scratch']
  #allocation2 [shape = 'f32[49,64]{1,0:T(8,128)}', space=vmem, size = 0x7000, scoped, tag = 'scratch operand']
  #allocation3 [shape = 'f32[49,128]{1,0:T(8,128)}', space=vmem, size = 0x7000, scoped, tag = 'scratch operand']
  %s0 = inlined_call_operand.vmem [shape: f32[2,49,32], index: 0, kind: input, shape index: {}]
  %s1 = inlined_call_operand.vmem [shape: f32[64,192], index: 1, kind: input, shape index: {}]
  %s2 = inlined_call_operand.vmem [shape: f32[1,192], index: 2, kind: input, shape index: {}]
  %s3 = inlined_call_operand.vmem [shape: f32[49,49], index: 3, kind: input, shape index: {}]
  %s4 = inlined_call_operand.vmem [shape: f32[49,64], index: 4, kind: output, shape index: {}]
  %s5 = sld [smem:[#allocation0]]
  $region26: #{aft_full.1} parent=0
    _
  %s7 = ssub.s32 1, %s5
  %s8 = scalar_select 0, %s7, %s5
  // Predicated region
  $region2: #{aft_full.1} parent=0 // pred_check
    _
  $region3: #{aft_full.1} parent=0 // pred_check_branch
    %10 = sbr.rel (0) target = $region5
  $region4: #{aft_full.1} parent=0 // pred_region
    _
  $region5: #{aft_full.1} parent=0 // pred_fallthru
    _
  // Predicated region
  $region6: #{aft_full.1} parent=0 // pred_check
    _
  $region7: #{aft_full.1} parent=0 // pred_check_branch
    %12 = sbr.rel (0) target = $region9
  $region8: #{aft_full.1} parent=0 // pred_region
    _
  $region9: #{aft_full.1} parent=0 // pred_fallthru
    _
  // Predicated region
  $region10: #{aft_full.1} parent=0 // pred_check
    _
  $region11: #{aft_full.1} parent=0 // pred_check_branch
    %14 = sbr.rel (0) target = $region13
  $region12: #{aft_full.1} parent=0 // pred_region
    _
  $region13: #{aft_full.1} parent=0 // pred_fallthru
    _
  // Predicated region
  $region14: #{aft_full.1} parent=0 // pred_check
    _
  $region15: #{aft_full.1} parent=0 // pred_check_branch
    %16 = sbr.rel (0) target = $region17
  $region16: #{aft_full.1} parent=0 // pred_region
    _
  $region17: #{aft_full.1} parent=0 // pred_fallthru
    _
  %v17 = vld [vmem:[%s0] sm:$0xff]
  %v18 = vld [vmem:[%s0 + $0x8] sm:$0xff]
  %v19 = vld [vmem:[%s0 + $0x10] sm:$0xff]
  %v20 = vld [vmem:[%s0 + $0x18] sm:$0xff]
  %v21 = vld [vmem:[%s0 + $0x20] sm:$0xff]
  %v22 = vld [vmem:[%s0 + $0x28] sm:$0xff]
  %v23 = vld [vmem:[%s0 + $0x30] sm:$0x1]
  %vm24 = vcmask 261120
  %25 = vst.msk [vmem:[#allocation2] sm:$0xff] %vm24, %v17
  %26 = vst.msk [vmem:[#allocation2 + $0x8] sm:$0xff] %vm24, %v18
  %27 = vst.msk [vmem:[#allocation2 + $0x10] sm:$0xff] %vm24, %v19
  %28 = vst.msk [vmem:[#allocation2 + $0x18] sm:$0xff] %vm24, %v20
  %29 = vst.msk [vmem:[#allocation2 + $0x20] sm:$0xff] %vm24, %v21
  %30 = vst.msk [vmem:[#allocation2 + $0x28] sm:$0xff] %vm24, %v22
  %vm31 = vcmask 253952
  %32 = vst.msk [vmem:[#allocation2 + $0x30] sm:$0x1] %vm31, %v23
  %s33 = scalar_lea.vmem %s0, 56
  %v34 = vld [vmem:[%s33] sm:$0xff]
  %v35 = vld [vmem:[%s33 + $0x8] sm:$0xff]
  %v36 = vld [vmem:[%s33 + $0x10] sm:$0xff]
  %v37 = vld [vmem:[%s33 + $0x18] sm:$0xff]
  %v38 = vld [vmem:[%s33 + $0x20] sm:$0xff]
  %v39 = vld [vmem:[%s33 + $0x28] sm:$0xff]
  %v40 = vld [vmem:[%s33 + $0x30] sm:$0x1]
  %48 = vrot.lane.b32.xlu0 %v34, 32
  %v49 = vpop.permute.xlu0 %48
  %50 = vrot.lane.b32.xlu0 %v35, 32
  %v51 = vpop.permute.xlu0 %50
  %52 = vrot.lane.b32.xlu0 %v36, 32
  %v53 = vpop.permute.xlu0 %52
  %54 = vrot.lane.b32.xlu0 %v37, 32
  %v55 = vpop.permute.xlu0 %54
  %56 = vrot.lane.b32.xlu0 %v38, 32
  %v57 = vpop.permute.xlu0 %56
  %58 = vrot.lane.b32.xlu0 %v39, 32
  %v59 = vpop.permute.xlu0 %58
  %60 = vrot.lane.b32.xlu0 %v40, 32
  %v61 = vpop.permute.xlu0 %60
  %vm69 = vcmask 523520
  %70 = vst.msk [vmem:[#allocation2] sm:$0xff] %vm69, %v49
  %71 = vst.msk [vmem:[#allocation2 + $0x8] sm:$0xff] %vm69, %v51
  %72 = vst.msk [vmem:[#allocation2 + $0x10] sm:$0xff] %vm69, %v53
  %73 = vst.msk [vmem:[#allocation2 + $0x18] sm:$0xff] %vm69, %v55
  %74 = vst.msk [vmem:[#allocation2 + $0x20] sm:$0xff] %vm69, %v57
  %75 = vst.msk [vmem:[#allocation2 + $0x28] sm:$0xff] %vm69, %v59
  %vm76 = vcmask 516352
  %77 = vst.msk [vmem:[#allocation2 + $0x30] sm:$0x1] %vm76, %v61
  %v78 = vld [vmem:[#allocation2] sm:$0xff]
  %v79 = vld [vmem:[#allocation2 + $0x8] sm:$0xff]
  %v80 = vld [vmem:[#allocation2 + $0x10] sm:$0xff]
  %v81 = vld [vmem:[#allocation2 + $0x18] sm:$0xff]
  %v82 = vld [vmem:[#allocation2 + $0x20] sm:$0xff]
  %v83 = vld [vmem:[#allocation2 + $0x28] sm:$0xff]
  %v84 = vld [vmem:[#allocation2 + $0x30] sm:$0x1]
  %v85 = vld [vmem:[%s1] sm:$0xff]
  %v86 = vld [vmem:[%s1 + $0x8] sm:$0xff]
  %v87 = vld [vmem:[%s1 + $0x10] sm:$0xff]
  %v88 = vld [vmem:[%s1 + $0x18] sm:$0xff]
  %v89 = vld [vmem:[%s1 + $0x20] sm:$0xff]
  %v90 = vld [vmem:[%s1 + $0x28] sm:$0xff]
  %v91 = vld [vmem:[%s1 + $0x30] sm:$0xff]
  %v92 = vld [vmem:[%s1 + $0x38] sm:$0xff]
  %v93 = vld [vmem:[%s1 + $0x40] sm:$0xff]
  %v94 = vld [vmem:[%s1 + $0x48] sm:$0xff]
  %v95 = vld [vmem:[%s1 + $0x50] sm:$0xff]
  %v96 = vld [vmem:[%s1 + $0x58] sm:$0xff]
  %v97 = vld [vmem:[%s1 + $0x60] sm:$0xff]
  %v98 = vld [vmem:[%s1 + $0x68] sm:$0xff]
  %v99 = vld [vmem:[%s1 + $0x70] sm:$0xff]
  %v100 = vld [vmem:[%s1 + $0x78] sm:$0xff]
  %v101 = vld [vmem:[%s2] sm:$0x3]
  %v103 = vlaneseq
  %v104 = vshrl.u32 %v103, 7
  %v105 = vsub.s32 0, %v104
  %v106 = vrot.slane %v101, %v105
  %v107 = vlaneseq
  %v108 = vshrl.u32 %v107, 7
  %v109 = vsub.s32 1, %v108
  %v110 = vrot.slane %v101, %v109
  %vm113 = vcmask 523264
  %v115 = vsel %vm113, %v78, 0
  %v118 = vsel %vm113, %v79, 0
  %v121 = vsel %vm113, %v80, 0
  %v124 = vsel %vm113, %v81, 0
  %v127 = vsel %vm113, %v82, 0
  %v130 = vsel %vm113, %v83, 0
  %v133 = vsel %vm113, %v84, 0
  %135 = vmatprep.subr.mxu0 %v86
  %136 = vmatpush1.msra.mxu0 %v85
  %137 = vmatprep.subr.mxu0 %v88
  %138 = vmatpush1.msra.mxu0 %v87
  %139 = vmatprep.subr.mxu0 %v90
  %140 = vmatpush1.msra.mxu0 %v89
  %141 = vmatprep.subr.mxu0 %v92
  %142 = vmatpush1.msra.mxu0 %v91
  %143 = vmatprep.subr.mxu0 %v94
  %144 = vmatpush1.msra.mxu0 %v93
  %145 = vmatprep.subr.mxu0 %v96
  %146 = vmatpush1.msra.mxu0 %v95
  %147 = vmatprep.subr.mxu0 %v98
  %148 = vmatpush1.msra.mxu0 %v97
  %149 = vmatprep.subr.mxu0 %v100
  %150 = vmatpush1.msra.mxu0 %v99
  %151 = vmatprep.subr.mxu0 0.0
  %152 = vmatpush1.msra.mxu0 0.0
  %153 = vmatprep.subr.mxu0 0.0
  %154 = vmatpush1.msra.mxu0 0.0
  %155 = vmatprep.subr.mxu0 0.0
  %156 = vmatpush1.msra.mxu0 0.0
  %157 = vmatprep.subr.mxu0 0.0
  %158 = vmatpush1.msra.mxu0 0.0
  %159 = vmatprep.subr.mxu0 0.0
  %160 = vmatpush1.msra.mxu0 0.0
  %161 = vmatprep.subr.mxu0 0.0
  %162 = vmatpush1.msra.mxu0 0.0
  %163 = vmatprep.subr.mxu0 0.0
  %164 = vmatpush1.msra.mxu0 0.0
  %165 = vmatprep.subr.mxu0 0.0
  %166 = vmatpush1.msra.mxu0 0.0
  %167 = vmatprep.subr.mxu0 0.0
  %168 = vmatpush1.msra.mxu0 0.0
  %169 = vmatprep.subr.mxu0 0.0
  %170 = vmatpush1.msra.mxu0 0.0
  %171 = vmatprep.subr.mxu0 0.0
  %172 = vmatpush1.msra.mxu0 0.0
  %173 = vmatprep.subr.mxu0 0.0
  %174 = vmatpush1.msra.mxu0 0.0
  %175 = vmatprep.subr.mxu0 0.0
  %176 = vmatpush1.msra.mxu0 0.0
  %177 = vmatprep.subr.mxu0 0.0
  %178 = vmatpush1.msra.mxu0 0.0
  %179 = vmatprep.subr.mxu0 0.0
  %180 = vmatpush1.msra.mxu0 0.0
  %181 = vmatprep.subr.mxu0 0.0
  %182 = vmatpush1.msra.mxu0 0.0
  %183 = vmatprep.subr.mxu0 0.0
  %184 = vmatpush1.msra.mxu0 0.0
  %185 = vmatprep.subr.mxu0 0.0
  %186 = vmatpush1.msra.mxu0 0.0
  %187 = vmatprep.subr.mxu0 0.0
  %188 = vmatpush1.msra.mxu0 0.0
  %189 = vmatprep.subr.mxu0 0.0
  %190 = vmatpush1.msra.mxu0 0.0
  %191 = vmatprep.subr.mxu0 0.0
  %192 = vmatpush1.msra.mxu0 0.0
  %193 = vmatprep.subr.mxu0 0.0
  %194 = vmatpush1.msra.mxu0 0.0
  %195 = vmatprep.subr.mxu0 0.0
  %196 = vmatpush1.msra.mxu0 0.0
  %197 = vmatprep.subr.mxu0 0.0
  %198 = vmatpush1.msra.mxu0 0.0
  %199 = vmatprep.mubr.f32.mxu0 0.0
  %200 = vmatmul.mubr.f32.gmra.mrb[0].mxu0 %v115
  %v201 = vpop.f32.mrb[0].mxu0
  %v202 = vadd.f32 %v106, %v201
  %v203 = vpop.f32.mrb[0].mxu0
  %v204 = vadd.f32 %v110, %v203
  %205 = vmatprep.mubr.f32.mxu0 0.0
  %206 = vmatmul.mubr.f32.gmra.mrb[0].mxu0 %v118
  %v207 = vpop.f32.mrb[0].mxu0
  %v208 = vadd.f32 %v106, %v207
  %v209 = vpop.f32.mrb[0].mxu0
  %v210 = vadd.f32 %v110, %v209
  %211 = vmatprep.mubr.f32.mxu0 0.0
  %212 = vmatmul.mubr.f32.gmra.mrb[0].mxu0 %v121
  %v213 = vpop.f32.mrb[0].mxu0
  %v214 = vadd.f32 %v106, %v213
  %v215 = vpop.f32.mrb[0].mxu0
  %v216 = vadd.f32 %v110, %v215
  %217 = vmatprep.mubr.f32.mxu0 0.0
  %218 = vmatmul.mubr.f32.gmra.mrb[0].mxu0 %v124
  %v219 = vpop.f32.mrb[0].mxu0
  %v220 = vadd.f32 %v106, %v219
  %v221 = vpop.f32.mrb[0].mxu0
  %v222 = vadd.f32 %v110, %v221
  %223 = vmatprep.mubr.f32.mxu0 0.0
  %224 = vmatmul.mubr.f32.gmra.mrb[0].mxu0 %v127
  %v225 = vpop.f32.mrb[0].mxu0
  %v226 = vadd.f32 %v106, %v225
  %v227 = vpop.f32.mrb[0].mxu0
  %v228 = vadd.f32 %v110, %v227
  %229 = vmatprep.mubr.f32.mxu0 0.0
  %230 = vmatmul.mubr.f32.gmra.mrb[0].mxu0 %v130
  %v231 = vpop.f32.mrb[0].mxu0
  %v232 = vadd.f32 %v106, %v231
  %v233 = vpop.f32.mrb[0].mxu0
  %v234 = vadd.f32 %v110, %v233
  %235 = vmatprep.mubr.f32.mxu0 0.0
  %236 = vmatmul.mubr.f32.gmra.mrb[0].mxu0 %v133
  %v237 = vpop.f32.mrb[0].mxu0
  %v238 = vadd.f32 %v106, %v237
  %v239 = vpop.f32.mrb[0].mxu0
  %v240 = vadd.f32 %v110, %v239
  %241 = vdwg.mxu0
  %vm242 = vcmask 1048064
  %v243 = vsel %vm242, %v202, -inf
  %v244 = vsel %vm242, %v208, -inf
  %v245 = vsel %vm242, %v214, -inf
  %v246 = vsel %vm242, %v220, -inf
  %v247 = vsel %vm242, %v226, -inf
  %v248 = vmax.f32 %v243, %v247
  %v249 = vsel %vm242, %v232, -inf
  %v250 = vmax.f32 %v244, %v249
  %vm251 = vcmask 1040896
  %v252 = vsel %vm251, %v238, -inf
  %v253 = vmax.f32 %v245, %v252
  %v254 = vmax.f32 %v248, %v250
  %v255 = vmax.f32 %v253, %v246
  %v256 = vmax.f32 %v254, %v255
  %v257 = vrot.slane %v256, 4
  %v258 = vmax.f32 %v256, %v257
  %v259 = vrot.slane %v258, 2
  %v260 = vmax.f32 %v258, %v259
  %v261 = vrot.slane %v260, 1
  %v262 = vmax.f32 %v260, %v261
  %v263 = vsub.f32 %v202, %v262
  %v264 = vsub.f32 %v208, %v262
  %v265 = vsub.f32 %v214, %v262
  %v266 = vsub.f32 %v220, %v262
  %v267 = vsub.f32 %v226, %v262
  %v268 = vsub.f32 %v232, %v262
  %v269 = vsub.f32 %v238, %v262
  %v270 = vmul.f32 %v263, 1.442695
  %v271 = vpow.pop %v270
  %v272 = vmul.f32 %v264, 1.442695
  %v273 = vpow.pop %v272
  %v274 = vmul.f32 %v265, 1.442695
  %v275 = vpow.pop %v274
  %v276 = vmul.f32 %v266, 1.442695
  %v277 = vpow.pop %v276
  %v278 = vmul.f32 %v267, 1.442695
  %v279 = vpow.pop %v278
  %v280 = vmul.f32 %v268, 1.442695
  %v281 = vpow.pop %v280
  %v282 = vmul.f32 %v269, 1.442695
  %v283 = vpow.pop %v282
  %291 = vrot.lane.b32.xlu0 %v204, 64
  %v292 = vpop.permute.xlu0 %291
  %293 = vrot.lane.b32.xlu0 %v210, 64
  %v294 = vpop.permute.xlu0 %293
  %295 = vrot.lane.b32.xlu0 %v216, 64
  %v296 = vpop.permute.xlu0 %295
  %297 = vrot.lane.b32.xlu0 %v222, 64
  %v298 = vpop.permute.xlu0 %297
  %299 = vrot.lane.b32.xlu0 %v228, 64
  %v300 = vpop.permute.xlu0 %299
  %301 = vrot.lane.b32.xlu0 %v234, 64
  %v302 = vpop.permute.xlu0 %301
  %303 = vrot.lane.b32.xlu0 %v240, 64
  %v304 = vpop.permute.xlu0 %303
  %v312 = vmul.f32 %v271, %v292
  %v313 = vmul.f32 %v273, %v294
  %v314 = vmul.f32 %v275, %v296
  %v315 = vmul.f32 %v277, %v298
  %v316 = vmul.f32 %v279, %v300
  %v317 = vmul.f32 %v281, %v302
  %v318 = vmul.f32 %v283, %v304
  %326 = vrot.lane.b32.xlu0 %v312, 64
  %v327 = vpop.permute.xlu0 %326
  %328 = vrot.lane.b32.xlu0 %v313, 64
  %v329 = vpop.permute.xlu0 %328
  %330 = vrot.lane.b32.xlu0 %v314, 64
  %v331 = vpop.permute.xlu0 %330
  %332 = vrot.lane.b32.xlu0 %v315, 64
  %v333 = vpop.permute.xlu0 %332
  %334 = vrot.lane.b32.xlu0 %v316, 64
  %v335 = vpop.permute.xlu0 %334
  %336 = vrot.lane.b32.xlu0 %v317, 64
  %v337 = vpop.permute.xlu0 %336
  %338 = vrot.lane.b32.xlu0 %v318, 64
  %v339 = vpop.permute.xlu0 %338
  %347 = vst.msk [vmem:[#allocation3] sm:$0xff] %vm113, %v327
  %348 = vst.msk [vmem:[#allocation3 + $0x8] sm:$0xff] %vm113, %v329
  %349 = vst.msk [vmem:[#allocation3 + $0x10] sm:$0xff] %vm113, %v331
  %350 = vst.msk [vmem:[#allocation3 + $0x18] sm:$0xff] %vm113, %v333
  %351 = vst.msk [vmem:[#allocation3 + $0x20] sm:$0xff] %vm113, %v335
  %352 = vst.msk [vmem:[#allocation3 + $0x28] sm:$0xff] %vm113, %v337
  %vm353 = vcmask 516096
  %354 = vst.msk [vmem:[#allocation3 + $0x30] sm:$0x1] %vm353, %v339
  %355 = vst.msk [vmem:[#allocation3] sm:$0xff] %vm242, %v271
  %356 = vst.msk [vmem:[#allocation3 + $0x8] sm:$0xff] %vm242, %v273
  %357 = vst.msk [vmem:[#allocation3 + $0x10] sm:$0xff] %vm242, %v275
  %358 = vst.msk [vmem:[#allocation3 + $0x18] sm:$0xff] %vm242, %v277
  %359 = vst.msk [vmem:[#allocation3 + $0x20] sm:$0xff] %vm242, %v279
  %360 = vst.msk [vmem:[#allocation3 + $0x28] sm:$0xff] %vm242, %v281
  %361 = vst.msk [vmem:[#allocation3 + $0x30] sm:$0x1] %vm251, %v283
  %v362 = vld [vmem:[%s3] sm:$0xff]
  %v363 = vld [vmem:[%s3 + $0x8] sm:$0xff]
  %v364 = vld [vmem:[%s3 + $0x10] sm:$0xff]
  %v365 = vld [vmem:[%s3 + $0x18] sm:$0xff]
  %v366 = vld [vmem:[%s3 + $0x20] sm:$0xff]
  %v367 = vld [vmem:[%s3 + $0x28] sm:$0xff]
  %v368 = vld [vmem:[%s3 + $0x30] sm:$0x1]
  %v369 = vld [vmem:[#allocation3] sm:$0xff]
  %v370 = vld [vmem:[#allocation3 + $0x8] sm:$0xff]
  %v371 = vld [vmem:[#allocation3 + $0x10] sm:$0xff]
  %v372 = vld [vmem:[#allocation3 + $0x18] sm:$0xff]
  %v373 = vld [vmem:[#allocation3 + $0x20] sm:$0xff]
  %v374 = vld [vmem:[#allocation3 + $0x28] sm:$0xff]
  %v375 = vld [vmem:[#allocation3 + $0x30] sm:$0x1]
  %vm376 = vcmask 400384
  %v378 = vsel %vm376, %v362, 0
  %v381 = vsel %vm376, %v363, 0
  %v384 = vsel %vm376, %v364, 0
  %v387 = vsel %vm376, %v365, 0
  %v390 = vsel %vm376, %v366, 0
  %v393 = vsel %vm376, %v367, 0
  %v396 = vsel %vm376, %v368, 0
  %vm398 = vcmask 1040384
  %v400 = vsel %vm398, %v375, 0
  %402 = vmatprep.subr.mxu0 0.0
  %403 = vmatpush1.msra.mxu0 %v369
  %404 = vmatprep.subr.mxu0 0.0
  %405 = vmatpush1.msra.mxu0 %v370
  %406 = vmatprep.subr.mxu0 0.0
  %407 = vmatpush1.msra.mxu0 %v371
  %408 = vmatprep.subr.mxu0 0.0
  %409 = vmatpush1.msra.mxu0 %v372
  %410 = vmatprep.subr.mxu0 0.0
  %411 = vmatpush1.msra.mxu0 %v373
  %412 = vmatprep.subr.mxu0 0.0
  %413 = vmatpush1.msra.mxu0 %v374
  %414 = vmatprep.subr.mxu0 0.0
  %415 = vmatpush1.msra.mxu0 %v400
  %416 = vmatprep.subr.mxu0 0.0
  %417 = vmatpush1.msra.mxu0 0.0
  %418 = vmatprep.subr.mxu0 0.0
  %419 = vmatpush1.msra.mxu0 0.0
  %420 = vmatprep.subr.mxu0 0.0
  %421 = vmatpush1.msra.mxu0 0.0
  %422 = vmatprep.subr.mxu0 0.0
  %423 = vmatpush1.msra.mxu0 0.0
  %424 = vmatprep.subr.mxu0 0.0
  %425 = vmatpush1.msra.mxu0 0.0
  %426 = vmatprep.subr.mxu0 0.0
  %427 = vmatpush1.msra.mxu0 0.0
  %428 = vmatprep.subr.mxu0 0.0
  %429 = vmatpush1.msra.mxu0 0.0
  %430 = vmatprep.subr.mxu0 0.0
  %431 = vmatpush1.msra.mxu0 0.0
  %432 = vmatprep.subr.mxu0 0.0
  %433 = vmatpush1.msra.mxu0 0.0
  %434 = vmatprep.subr.mxu0 0.0
  %435 = vmatpush1.msra.mxu0 0.0
  %436 = vmatprep.subr.mxu0 0.0
  %437 = vmatpush1.msra.mxu0 0.0
  %438 = vmatprep.subr.mxu0 0.0
  %439 = vmatpush1.msra.mxu0 0.0
  %440 = vmatprep.subr.mxu0 0.0
  %441 = vmatpush1.msra.mxu0 0.0
  %442 = vmatprep.subr.mxu0 0.0
  %443 = vmatpush1.msra.mxu0 0.0
  %444 = vmatprep.subr.mxu0 0.0
  %445 = vmatpush1.msra.mxu0 0.0
  %446 = vmatprep.subr.mxu0 0.0
  %447 = vmatpush1.msra.mxu0 0.0
  %448 = vmatprep.subr.mxu0 0.0
  %449 = vmatpush1.msra.mxu0 0.0
  %450 = vmatprep.subr.mxu0 0.0
  %451 = vmatpush1.msra.mxu0 0.0
  %452 = vmatprep.subr.mxu0 0.0
  %453 = vmatpush1.msra.mxu0 0.0
  %454 = vmatprep.subr.mxu0 0.0
  %455 = vmatpush1.msra.mxu0 0.0
  %456 = vmatprep.subr.mxu0 0.0
  %457 = vmatpush1.msra.mxu0 0.0
  %458 = vmatprep.subr.mxu0 0.0
  %459 = vmatpush1.msra.mxu0 0.0
  %460 = vmatprep.subr.mxu0 0.0
  %461 = vmatpush1.msra.mxu0 0.0
  %462 = vmatprep.subr.mxu0 0.0
  %463 = vmatpush1.msra.mxu0 0.0
  %464 = vmatprep.subr.mxu0 0.0
  %465 = vmatpush1.msra.mxu0 0.0
  %466 = vmatprep.mubr.f32.mxu0 0.0
  %467 = vmatmul.mubr.f32.gmra.mrb[0].mxu0 %v378
  %v468 = vpop.f32.mrb[0].mxu0
  %v469 = vadd.f32 0.0, %v468
  %v470 = vpop.f32.mrb[0].mxu0
  %471 = vmatprep.mubr.f32.mxu0 0.0
  %472 = vmatmul.mubr.f32.gmra.mrb[0].mxu0 %v381
  %v473 = vpop.f32.mrb[0].mxu0
  %v474 = vadd.f32 0.0, %v473
  %v475 = vpop.f32.mrb[0].mxu0
  %476 = vmatprep.mubr.f32.mxu0 0.0
  %477 = vmatmul.mubr.f32.gmra.mrb[0].mxu0 %v384
  %v478 = vpop.f32.mrb[0].mxu0
  %v479 = vadd.f32 0.0, %v478
  %v480 = vpop.f32.mrb[0].mxu0
  %481 = vmatprep.mubr.f32.mxu0 0.0
  %482 = vmatmul.mubr.f32.gmra.mrb[0].mxu0 %v387
  %v483 = vpop.f32.mrb[0].mxu0
  %v484 = vadd.f32 0.0, %v483
  %v485 = vpop.f32.mrb[0].mxu0
  %486 = vmatprep.mubr.f32.mxu0 0.0
  %487 = vmatmul.mubr.f32.gmra.mrb[0].mxu0 %v390
  %v488 = vpop.f32.mrb[0].mxu0
  %v489 = vadd.f32 0.0, %v488
  %v490 = vpop.f32.mrb[0].mxu0
  %491 = vmatprep.mubr.f32.mxu0 0.0
  %492 = vmatmul.mubr.f32.gmra.mrb[0].mxu0 %v393
  %v493 = vpop.f32.mrb[0].mxu0
  %v494 = vadd.f32 0.0, %v493
  %v495 = vpop.f32.mrb[0].mxu0
  %496 = vmatprep.mubr.f32.mxu0 0.0
  %497 = vmatmul.mubr.f32.gmra.mrb[0].mxu0 %v396
  %v498 = vpop.f32.mrb[0].mxu0
  %v499 = vadd.f32 0.0, %v498
  %v500 = vpop.f32.mrb[0].mxu0
  %501 = vdwg.mxu0
  %v502 = vxor.u32 %v202, 2147483648
  %v503 = vxor.u32 %v208, 2147483648
  %v504 = vxor.u32 %v214, 2147483648
  %v505 = vxor.u32 %v220, 2147483648
  %v506 = vxor.u32 %v226, 2147483648
  %v507 = vxor.u32 %v232, 2147483648
  %v508 = vxor.u32 %v238, 2147483648
  %v509 = vmul.f32 %v502, 1.442695
  %v510 = vpow.pop %v509
  %v511 = vmul.f32 %v503, 1.442695
  %v512 = vpow.pop %v511
  %v513 = vmul.f32 %v504, 1.442695
  %v514 = vpow.pop %v513
  %v515 = vmul.f32 %v505, 1.442695
  %v516 = vpow.pop %v515
  %v517 = vmul.f32 %v506, 1.442695
  %v518 = vpow.pop %v517
  %v519 = vmul.f32 %v507, 1.442695
  %v520 = vpow.pop %v519
  %v521 = vmul.f32 %v508, 1.442695
  %v522 = vpow.pop %v521
  %v523 = vadd.f32 %v510, 1.0
  %v524 = vadd.f32 %v512, 1.0
  %v525 = vadd.f32 %v514, 1.0
  %v526 = vadd.f32 %v516, 1.0
  %v527 = vadd.f32 %v518, 1.0
  %v528 = vadd.f32 %v520, 1.0
  %v529 = vadd.f32 %v522, 1.0
  %v530 = vrcp.pop %v523
  %v531 = vmul.f32 1.0, %v530
  %v532 = vrcp.pop %v524
  %v533 = vmul.f32 1.0, %v532
  %v534 = vrcp.pop %v525
  %v535 = vmul.f32 1.0, %v534
  %v536 = vrcp.pop %v526
  %v537 = vmul.f32 1.0, %v536
  %v538 = vrcp.pop %v527
  %v539 = vmul.f32 1.0, %v538
  %v540 = vrcp.pop %v528
  %v541 = vmul.f32 1.0, %v540
  %v542 = vrcp.pop %v529
  %v543 = vmul.f32 1.0, %v542
  %v544 = vrcp.pop %v469
  %v545 = vrcp.pop %v474
  %v546 = vrcp.pop %v479
  %v547 = vrcp.pop %v484
  %v548 = vrcp.pop %v489
  %v549 = vrcp.pop %v494
  %v550 = vrcp.pop %v499
  %558 = vrot.lane.b32.xlu0 %v544, 64
  %v559 = vpop.permute.xlu0 %558
  %560 = vrot.lane.b32.xlu0 %v545, 64
  %v561 = vpop.permute.xlu0 %560
  %562 = vrot.lane.b32.xlu0 %v546, 64
  %v563 = vpop.permute.xlu0 %562
  %564 = vrot.lane.b32.xlu0 %v547, 64
  %v565 = vpop.permute.xlu0 %564
  %566 = vrot.lane.b32.xlu0 %v548, 64
  %v567 = vpop.permute.xlu0 %566
  %568 = vrot.lane.b32.xlu0 %v549, 64
  %v569 = vpop.permute.xlu0 %568
  %570 = vrot.lane.b32.xlu0 %v550, 64
  %v571 = vpop.permute.xlu0 %570
  %v579 = vmul.f32 %v469, %v559
  %v580 = vmul.f32 %v474, %v561
  %v581 = vmul.f32 %v479, %v563
  %v582 = vmul.f32 %v484, %v565
  %v583 = vmul.f32 %v489, %v567
  %v584 = vmul.f32 %v494, %v569
  %v585 = vmul.f32 %v499, %v571
  %v586 = vmul.f32 %v531, %v579
  %v587 = vmul.f32 %v533, %v580
  %v588 = vmul.f32 %v535, %v581
  %v589 = vmul.f32 %v537, %v582
  %v590 = vmul.f32 %v539, %v583
  %v591 = vmul.f32 %v541, %v584
  %v592 = vmul.f32 %v543, %v585
  %593 = vst.msk [vmem:[%s4] sm:$0xff] %vm113, %v586
  %594 = vst.msk [vmem:[%s4 + $0x8] sm:$0xff] %vm113, %v587
  %595 = vst.msk [vmem:[%s4 + $0x10] sm:$0xff] %vm113, %v588
  %596 = vst.msk [vmem:[%s4 + $0x18] sm:$0xff] %vm113, %v589
  %597 = vst.msk [vmem:[%s4 + $0x20] sm:$0xff] %vm113, %v590
  %598 = vst.msk [vmem:[%s4 + $0x28] sm:$0xff] %vm113, %v591
  %599 = vst.msk [vmem:[%s4 + $0x30] sm:$0x1] %vm353, %v592
  // Predicated region
  $region18: #{aft_full.1} parent=0 // pred_check
    _
  $region19: #{aft_full.1} parent=0 // pred_check_branch
    %601 = sbr.rel (0) target = $region21
  $region20: #{aft_full.1} parent=0 // pred_region
    _
  $region21: #{aft_full.1} parent=0 // pred_fallthru
    _
  // Predicated region
  $region22: #{aft_full.1} parent=0 // pred_check
    _
  $region23: #{aft_full.1} parent=0 // pred_check_branch
    %603 = sbr.rel (0) target = $region25
  $region24: #{aft_full.1} parent=0 // pred_region
    _
  $region25: #{aft_full.1} parent=0 // pred_fallthru
    _

</llo_original>
